<compile_context>
chip_gen: v7x
topology: tpu7x:2x2x1
jax: 0.10.0
libtpu: 0.0.40
codegen_flags: <defaults>
</compile_context>

<pallas_src>
import jax
import jax.numpy as jnp
from jax import lax
from jax.experimental import pallas as pl
from jax.experimental.pallas import tpu as pltpu


def proofreader_kernel(xt_ref, wihf_ref, whhf_ref, bf_ref,
                       wihb_ref, bb_ref,
                       fcwf_ref, fcwb_ref, fcb_ref,
                       o_ref, xw_ref):
    T, B, I = xt_ref.shape                     # time-major block: (T, bb, I) bf16
    H = whhf_ref.shape[0]

    xt = xt_ref[...]                           # (T, B, I) bf16 (pre-cast in wrapper)
    whhf = whhf_ref[...]                       # (H, H) bf16, loaded once (hoisted)

    # ---- Hoisted input projection: ONE (T*B, I) @ (I, H) matmul + fused bias,
    #      written time-major to VMEM scratch so the loop reads xw_ref[t]
    #      (leading-axis, contiguous slab) off the serial critical path.
    xw_ref[...] = (jnp.dot(xt.reshape(T * B, I), wihf_ref[...],
                           preferred_element_type=jnp.float32)
                   + bf_ref[...]).reshape(T, B, H)          # (T, B, H) f32

    # ---- Backward-direction contribution (independent of the recurrence,
    #      scheduled first so it overlaps the latency-bound loop).
    # The bwd RNN starts at t = T-1 with zero hidden state, so its output at the
    # last time step is exactly its first step:
    #   tanh(x_{T-1} @ W_ih_b^T + b_ih_b + b_hh_b)          (W_hh_b never applied)
    # NOTE: valid only because the readout takes out[:, -1, :] and h0 == 0.
    h_bwd = jnp.tanh(
        jnp.dot(xt[T - 1], wihb_ref[...], preferred_element_type=jnp.float32)
        + bb_ref[...])                                       # (B, H) f32
    y = (jnp.dot(h_bwd.astype(jnp.bfloat16), fcwb_ref[...],
                 preferred_element_type=jnp.float32)
         + fcb_ref[...])                                     # (B, O) f32

    # ---- Forward recurrence.  Per step: (B, H) @ (H, H) bf16 matmul (f32 acc),
    #      f32 add of the precomputed xw slab, f32 tanh (EUP).  h carried in f32.
    def step(t, h):
        pre = xw_ref[t] + jnp.dot(h.astype(jnp.bfloat16), whhf,
                                  preferred_element_type=jnp.float32)
        return jnp.tanh(pre)

    h = lax.fori_loop(0, T, step, jnp.zeros((B, H), jnp.float32),
                      unroll=(T <= 16))

    # ---- Dropout = identity (eval) + final Linear(2H -> O), split into
    #      forward/backward halves to avoid an in-kernel concatenate.
    y = y + jnp.dot(h.astype(jnp.bfloat16), fcwf_ref[...],
                    preferred_element_type=jnp.float32)
    o_ref[...] = y.astype(o_ref.dtype)


def proofreader_forward(x, params, *, batch_block=256):
    """x: (B, T, I) float32 (batch_first, like the PyTorch module).

    params: dict of transposed f32 weights / fused biases from init_params.
    Wrapper does layout/dtype plumbing only: time-major bf16 x, bf16 MXU weights.
    """
    B, T, I = x.shape
    H = params["w_hh_f"].shape[0]
    O = params["fc_b"].shape[-1]
    bb = min(batch_block, B)
    grid = (pl.cdiv(B, bb),)

    # --- glue: time-major bf16 activations, bf16 MXU weights, f32 biases -------
    x_t = jnp.transpose(x, (1, 0, 2)).astype(jnp.bfloat16)   # (T, B, I) bf16
    wihf = params["w_ih_f"].astype(jnp.bfloat16)              # (I, H)
    whhf = params["w_hh_f"].astype(jnp.bfloat16)              # (H, H)
    wihb = params["w_ih_b"].astype(jnp.bfloat16)              # (I, H)
    fcwf = params["fc_w_f"].astype(jnp.bfloat16)               # (H, O)
    fcwb = params["fc_w_b"].astype(jnp.bfloat16)               # (H, O)
    b_f, b_b, fc_b = params["b_f"], params["b_b"], params["fc_b"]   # f32

    args = (x_t, wihf, whhf, b_f, wihb, b_b, fcwf, fcwb, fc_b)

    def weight_spec(arr):
        nd = arr.ndim
        return pl.BlockSpec(arr.shape, lambda b, _nd=nd: (0,) * _nd)

    in_specs = [pl.BlockSpec((T, bb, I), lambda b: (0, b, 0))] + \
               [weight_spec(a) for a in args[1:]]
    out_specs = pl.BlockSpec((bb, O), lambda b: (b, 0))

    # Advisory cost estimate (input proj + recurrence + bwd step + fc).
    flops = (2 * B * T * I * H       # x @ W_ih_f
             + 2 * B * T * H * H     # h @ W_hh_f
             + 2 * B * I * H         # x_last @ W_ih_b
             + 2 * B * (2 * H) * O)  # fc
    transcendentals = B * T * H + B * H
    weight_bytes = 2 * (2 * I * H + H * H + 2 * H * O) + 4 * (2 * H + O)
    bytes_accessed = 2 * B * T * I + weight_bytes + 4 * B * O

    # VMEM budget from the real per-block footprint (x block + weights double-
    # buffered, xw f32 scratch, output block) + headroom; capped at 48 MiB so it
    # is safe on v7x (64 MiB physical) while leaving room on v5e/v6e (128 MiB).
    block_bytes = (2 * (2 * T * bb * I)        # x block, bf16, double-buffered
                   + 2 * weight_bytes          # weights, double-buffered
                   + 4 * T * bb * H            # xw scratch, f32
                   + 2 * (4 * bb * O))         # output block, f32, double-buffered
    vmem_limit = int(min(block_bytes + (16 << 20), 48 << 20))

    return pl.pallas_call(
        proofreader_kernel,
        out_shape=jax.ShapeDtypeStruct((B, O), jnp.float32),
        grid=grid,
        in_specs=in_specs,
        out_specs=out_specs,
        scratch_shapes=[pltpu.VMEM((T, bb, H), jnp.float32)],   # time-major xw
        compiler_params=pltpu.CompilerParams(
            dimension_semantics=("parallel",),   # batch tiles shard across TCs (v7x)
            vmem_limit_bytes=vmem_limit),
        cost_estimate=pl.CostEstimate(flops=flops,
                                      transcendentals=transcendentals,
                                      bytes_accessed=bytes_accessed),
    )(*args)


def init_params(key, input_size, hidden_dim, output_size):
    """Deterministic init mimicking PyTorch's U(-1/sqrt(H), 1/sqrt(H)).

    Returns f32 master params, transposed to (in, out) layouts and with RNN
    biases fused (b_ih + b_hh); the wrapper casts matmul weights to bf16.
    """
    H, I, O = hidden_dim, input_size, output_size
    k = 1.0 / jnp.sqrt(jnp.float32(H))
    keys = jax.random.split(key, 11)
    u = lambda kk, shape, bound: jax.random.uniform(
        kk, shape, jnp.float32, minval=-bound, maxval=bound)

    # PyTorch layouts: W_ih (H, I), W_hh (H, H), biases (H,); fc W (O, 2H), b (O,)
    w_ih_f = u(keys[0], (H, I), k)
    w_hh_f = u(keys[1], (H, H), k)
    b_ih_f = u(keys[2], (H,), k)
    b_hh_f = u(keys[3], (H,), k)
    w_ih_b = u(keys[4], (H, I), k)
    b_ih_b = u(keys[5], (H,), k)
    b_hh_b = u(keys[6], (H,), k)
    kfc = 1.0 / jnp.sqrt(jnp.float32(2 * H))
    fc_w = u(keys[7], (O, 2 * H), kfc)
    fc_b = u(keys[8], (O,), kfc)

    return {
        "w_ih_f": w_ih_f.T,                                  # (I, H)
        "w_hh_f": w_hh_f.T,                                  # (H, H)
        "b_f": (b_ih_f + b_hh_f).reshape(1, H),              # (1, H)
        "w_ih_b": w_ih_b.T,                                  # (I, H)
        "b_b": (b_ih_b + b_hh_b).reshape(1, H),              # (1, H)
        "fc_w_f": fc_w[:, :H].T,                             # (H, O)
        "fc_w_b": fc_w[:, H:].T,                             # (H, O)
        "fc_b": fc_b.reshape(1, O),                          # (1, O)
    }


def reference_forward(x, params, matmul_dtype=jnp.float32):
    """Pure-JAX reference of the same semantics (for verification).

    matmul_dtype=jnp.bfloat16 reproduces the kernel's MXU-operand casts exactly;
    jnp.float32 is the module's nominal math.
    """
    B, T, I = x.shape
    H = params["w_hh_f"].shape[0]
    md = matmul_dtype
    dot = lambda a, b: jnp.dot(a.astype(md), b.astype(md),
                               preferred_element_type=jnp.float32)
    xw = (dot(x.reshape(B * T, I), params["w_ih_f"]).reshape(B, T, H)
          + params["b_f"])
    h = jnp.zeros((B, H), jnp.float32)
    for t in range(T):
        h = jnp.tanh(xw[:, t, :] + dot(h, params["w_hh_f"]))
    h_b = jnp.tanh(dot(x[:, -1, :], params["w_ih_b"]) + params["b_b"])
    return (dot(h, params["fc_w_f"]) + dot(h_b, params["fc_w_b"])
            + params["fc_b"])


if __name__ == "__main__":
    # Shapes consistent with the module: nn.RNN input size equals output_size,
    # n_layers=1 (required for init_hidden to match the single-layer nn.RNN).
    # NOTE: with H=32, O=16 the MXU/lane utilization is inherently low; these are
    # fixed by the model.  batch_block defaults to 256 so large-B inputs fill the
    # MXU rows and give >=2 grid tiles for v7x megacore; here B=2 so grid=(1,).
    batch, seq, output_size, hidden_dim = 2, 8, 16, 32

    key = jax.random.PRNGKey(0)
    kx, kp = jax.random.split(key)
    x = jax.random.normal(kx, (batch, seq, output_size), jnp.float32)
    params = init_params(kp, output_size, hidden_dim, output_size)

    out = proofreader_forward(x, params)
    out = jax.block_until_ready(out)

    assert out.shape == (batch, output_size)
    # Tight check against a reference that mirrors the kernel's bf16 MXU casts.
    ref_bf16 = reference_forward(x, params, matmul_dtype=jnp.bfloat16)
    assert jnp.allclose(out, ref_bf16, atol=1e-3, rtol=1e-3), \
        "kernel/bf16-reference mismatch"
    # Looser check against the module's nominal f32 math (bf16 rounding drift).
    ref_f32 = reference_forward(x, params, matmul_dtype=jnp.float32)
    assert jnp.allclose(out, ref_f32, atol=3e-2, rtol=3e-2), \
        "kernel/f32-reference mismatch"

    print("KERNEL_OK")
</pallas_src>

<mosaic_0001>
module attributes {stable_mosaic.version = 11 : i64} {
  func.func @proofreader_kernel(%arg0: i32, %arg1: memref<8x2x16xbf16, #tpu.memory_space<vmem>>, %arg2: memref<16x32xbf16, #tpu.memory_space<vmem>>, %arg3: memref<32x32xbf16, #tpu.memory_space<vmem>>, %arg4: memref<1x32xf32, #tpu.memory_space<vmem>>, %arg5: memref<16x32xbf16, #tpu.memory_space<vmem>>, %arg6: memref<1x32xf32, #tpu.memory_space<vmem>>, %arg7: memref<32x16xbf16, #tpu.memory_space<vmem>>, %arg8: memref<32x16xbf16, #tpu.memory_space<vmem>>, %arg9: memref<1x16xf32, #tpu.memory_space<vmem>>, %arg10: memref<2x16xf32, #tpu.memory_space<vmem>>, %arg11: memref<8x2x32xf32, #tpu.memory_space<vmem>>) attributes {dimension_semantics = [#tpu.dimension_semantics<parallel>], iteration_bounds = array<i64: 1>, scalar_prefetch = 0 : i64, scratch_operands = 1 : i64, tpu.core_type = #tpu.core_type<tc>, window_params = [{transform_indices = @transform_0, window_bounds = array<i64: 8, 2, 16>}, {pipeline_mode = #tpu.pipeline_mode<synchronous>, transform_indices = @transform_1, window_bounds = array<i64: 16, 32>}, {pipeline_mode = #tpu.pipeline_mode<synchronous>, transform_indices = @transform_2, window_bounds = array<i64: 32, 32>}, {pipeline_mode = #tpu.pipeline_mode<synchronous>, transform_indices = @transform_3, window_bounds = array<i64: 1, 32>}, {pipeline_mode = #tpu.pipeline_mode<synchronous>, transform_indices = @transform_4, window_bounds = array<i64: 16, 32>}, {pipeline_mode = #tpu.pipeline_mode<synchronous>, transform_indices = @transform_5, window_bounds = array<i64: 1, 32>}, {pipeline_mode = #tpu.pipeline_mode<synchronous>, transform_indices = @transform_6, window_bounds = array<i64: 32, 16>}, {pipeline_mode = #tpu.pipeline_mode<synchronous>, transform_indices = @transform_7, window_bounds = array<i64: 32, 16>}, {pipeline_mode = #tpu.pipeline_mode<synchronous>, transform_indices = @transform_8, window_bounds = array<i64: 1, 16>}, {transform_indices = @transform_9, window_bounds = array<i64: 2, 16>}]} {
    %c0 = arith.constant 0 : index
    %c0_0 = arith.constant 0 : index
    %c0_1 = arith.constant 0 : index
    %0 = vector.load %arg1[%c0, %c0_0, %c0_1] : memref<8x2x16xbf16, #tpu.memory_space<vmem>>, vector<8x2x16xbf16>
    %c0_2 = arith.constant 0 : index
    %c0_3 = arith.constant 0 : index
    %1 = vector.load %arg3[%c0_2, %c0_3] : memref<32x32xbf16, #tpu.memory_space<vmem>>, vector<32x32xbf16>
    %2 = vector.shape_cast %0 : vector<8x2x16xbf16> to vector<16x16xbf16>
    %c0_4 = arith.constant 0 : index
    %c0_5 = arith.constant 0 : index
    %3 = vector.load %arg2[%c0_4, %c0_5] : memref<16x32xbf16, #tpu.memory_space<vmem>>, vector<16x32xbf16>
    %cst = arith.constant dense<0.000000e+00> : vector<16x32xf32>
    %4 = tpu.matmul %2, %3, %cst {dimension_numbers = #tpu.dot_dimension_numbers<[1], [0], [0], [1], [0, 0, 1, 1], [], []>} : vector<16x16xbf16>, vector<16x32xbf16>, vector<16x32xf32> -> vector<16x32xf32>
    %c0_6 = arith.constant 0 : index
    %c0_7 = arith.constant 0 : index
    %5 = vector.load %arg4[%c0_6, %c0_7] : memref<1x32xf32, #tpu.memory_space<vmem>>, vector<1x32xf32>
    %6 = vector.broadcast %5 : vector<1x32xf32> to vector<16x32xf32>
    %7 = arith.addf %4, %6 : vector<16x32xf32>
    %8 = vector.shape_cast %7 : vector<16x32xf32> to vector<8x2x32xf32>
    %c0_8 = arith.constant 0 : index
    %c0_9 = arith.constant 0 : index
    %c0_10 = arith.constant 0 : index
    %9 = vector.load %arg11[%c0_8, %c0_9, %c0_10] : memref<8x2x32xf32, #tpu.memory_space<vmem>>, vector<8x2x32xf32>
    tpu.vector_store %arg11[%c0_8, %c0_9, %c0_10], %8 {strides = array<i32>} : memref<8x2x32xf32, #tpu.memory_space<vmem>>, vector<8x2x32xf32>,
    %10 = vector.extract_strided_slice %0 {offsets = [7, 0, 0], sizes = [1, 2, 16], strides = [1, 1, 1]} : vector<8x2x16xbf16> to vector<1x2x16xbf16>
    %11 = vector.shape_cast %10 : vector<1x2x16xbf16> to vector<2x16xbf16>
    %c0_11 = arith.constant 0 : index
    %c0_12 = arith.constant 0 : index
    %12 = vector.load %arg5[%c0_11, %c0_12] : memref<16x32xbf16, #tpu.memory_space<vmem>>, vector<16x32xbf16>
    %cst_13 = arith.constant dense<0.000000e+00> : vector<2x32xf32>
    %13 = tpu.matmul %11, %12, %cst_13 {dimension_numbers = #tpu.dot_dimension_numbers<[1], [0], [0], [1], [0, 0, 1, 1], [], []>} : vector<2x16xbf16>, vector<16x32xbf16>, vector<2x32xf32> -> vector<2x32xf32>
    %c0_14 = arith.constant 0 : index
    %c0_15 = arith.constant 0 : index
    %14 = vector.load %arg6[%c0_14, %c0_15] : memref<1x32xf32, #tpu.memory_space<vmem>>, vector<1x32xf32>
    %15 = vector.broadcast %14 : vector<1x32xf32> to vector<2x32xf32>
    %16 = arith.addf %13, %15 : vector<2x32xf32>
    %17 = math.tanh %16 : vector<2x32xf32>
    %18 = arith.truncf %17 : vector<2x32xf32> to vector<2x32xbf16>
    %c0_16 = arith.constant 0 : index
    %c0_17 = arith.constant 0 : index
    %19 = vector.load %arg8[%c0_16, %c0_17] : memref<32x16xbf16, #tpu.memory_space<vmem>>, vector<32x16xbf16>
    %cst_18 = arith.constant dense<0.000000e+00> : vector<2x16xf32>
    %20 = tpu.matmul %18, %19, %cst_18 {dimension_numbers = #tpu.dot_dimension_numbers<[1], [0], [0], [1], [0, 0, 1, 1], [], []>} : vector<2x32xbf16>, vector<32x16xbf16>, vector<2x16xf32> -> vector<2x16xf32>
    %c0_19 = arith.constant 0 : index
    %c0_20 = arith.constant 0 : index
    %21 = vector.load %arg9[%c0_19, %c0_20] : memref<1x16xf32, #tpu.memory_space<vmem>>, vector<1x16xf32>
    %22 = vector.broadcast %21 : vector<1x16xf32> to vector<2x16xf32>
    %23 = arith.addf %20, %22 : vector<2x16xf32>
    %cst_21 = arith.constant 0.000000e+00 : f32
    %24 = vector.broadcast %cst_21 : f32 to vector<2x32xf32>
    %c0_i32 = arith.constant 0 : i32
    %25 = arith.index_cast %c0_i32 : i32 to index
    %c0_22 = arith.constant 0 : index
    %c0_23 = arith.constant 0 : index
    %26 = vector.load %arg11[%25, %c0_22, %c0_23] : memref<8x2x32xf32, #tpu.memory_space<vmem>>, vector<1x2x32xf32>
    %27 = vector.shape_cast %26 : vector<1x2x32xf32> to vector<2x32xf32>
    %28 = arith.truncf %24 : vector<2x32xf32> to vector<2x32xbf16>
    %cst_24 = arith.constant dense<0.000000e+00> : vector<2x32xf32>
    %29 = tpu.matmul %28, %1, %cst_24 {dimension_numbers = #tpu.dot_dimension_numbers<[1], [0], [0], [1], [0, 0, 1, 1], [], []>} : vector<2x32xbf16>, vector<32x32xbf16>, vector<2x32xf32> -> vector<2x32xf32>
    %30 = arith.addf %27, %29 : vector<2x32xf32>
    %31 = math.tanh %30 : vector<2x32xf32>
    %c1_i32 = arith.constant 1 : i32
    %32 = arith.index_cast %c1_i32 : i32 to index
    %c0_25 = arith.constant 0 : index
    %c0_26 = arith.constant 0 : index
    %33 = vector.load %arg11[%32, %c0_25, %c0_26] : memref<8x2x32xf32, #tpu.memory_space<vmem>>, vector<1x2x32xf32>
    %34 = vector.shape_cast %33 : vector<1x2x32xf32> to vector<2x32xf32>
    %35 = arith.truncf %31 : vector<2x32xf32> to vector<2x32xbf16>
    %cst_27 = arith.constant dense<0.000000e+00> : vector<2x32xf32>
    %36 = tpu.matmul %35, %1, %cst_27 {dimension_numbers = #tpu.dot_dimension_numbers<[1], [0], [0], [1], [0, 0, 1, 1], [], []>} : vector<2x32xbf16>, vector<32x32xbf16>, vector<2x32xf32> -> vector<2x32xf32>
    %37 = arith.addf %34, %36 : vector<2x32xf32>
    %38 = math.tanh %37 : vector<2x32xf32>
    %c2_i32 = arith.constant 2 : i32
    %39 = arith.index_cast %c2_i32 : i32 to index
    %c0_28 = arith.constant 0 : index
    %c0_29 = arith.constant 0 : index
    %40 = vector.load %arg11[%39, %c0_28, %c0_29] : memref<8x2x32xf32, #tpu.memory_space<vmem>>, vector<1x2x32xf32>
    %41 = vector.shape_cast %40 : vector<1x2x32xf32> to vector<2x32xf32>
    %42 = arith.truncf %38 : vector<2x32xf32> to vector<2x32xbf16>
    %cst_30 = arith.constant dense<0.000000e+00> : vector<2x32xf32>
    %43 = tpu.matmul %42, %1, %cst_30 {dimension_numbers = #tpu.dot_dimension_numbers<[1], [0], [0], [1], [0, 0, 1, 1], [], []>} : vector<2x32xbf16>, vector<32x32xbf16>, vector<2x32xf32> -> vector<2x32xf32>
    %44 = arith.addf %41, %43 : vector<2x32xf32>
    %45 = math.tanh %44 : vector<2x32xf32>
    %c3_i32 = arith.constant 3 : i32
    %46 = arith.index_cast %c3_i32 : i32 to index
    %c0_31 = arith.constant 0 : index
    %c0_32 = arith.constant 0 : index
    %47 = vector.load %arg11[%46, %c0_31, %c0_32] : memref<8x2x32xf32, #tpu.memory_space<vmem>>, vector<1x2x32xf32>
    %48 = vector.shape_cast %47 : vector<1x2x32xf32> to vector<2x32xf32>
    %49 = arith.truncf %45 : vector<2x32xf32> to vector<2x32xbf16>
    %cst_33 = arith.constant dense<0.000000e+00> : vector<2x32xf32>
    %50 = tpu.matmul %49, %1, %cst_33 {dimension_numbers = #tpu.dot_dimension_numbers<[1], [0], [0], [1], [0, 0, 1, 1], [], []>} : vector<2x32xbf16>, vector<32x32xbf16>, vector<2x32xf32> -> vector<2x32xf32>
    %51 = arith.addf %48, %50 : vector<2x32xf32>
    %52 = math.tanh %51 : vector<2x32xf32>
    %c4_i32 = arith.constant 4 : i32
    %53 = arith.index_cast %c4_i32 : i32 to index
    %c0_34 = arith.constant 0 : index
    %c0_35 = arith.constant 0 : index
    %54 = vector.load %arg11[%53, %c0_34, %c0_35] : memref<8x2x32xf32, #tpu.memory_space<vmem>>, vector<1x2x32xf32>
    %55 = vector.shape_cast %54 : vector<1x2x32xf32> to vector<2x32xf32>
    %56 = arith.truncf %52 : vector<2x32xf32> to vector<2x32xbf16>
    %cst_36 = arith.constant dense<0.000000e+00> : vector<2x32xf32>
    %57 = tpu.matmul %56, %1, %cst_36 {dimension_numbers = #tpu.dot_dimension_numbers<[1], [0], [0], [1], [0, 0, 1, 1], [], []>} : vector<2x32xbf16>, vector<32x32xbf16>, vector<2x32xf32> -> vector<2x32xf32>
    %58 = arith.addf %55, %57 : vector<2x32xf32>
    %59 = math.tanh %58 : vector<2x32xf32>
    %c5_i32 = arith.constant 5 : i32
    %60 = arith.index_cast %c5_i32 : i32 to index
    %c0_37 = arith.constant 0 : index
    %c0_38 = arith.constant 0 : index
    %61 = vector.load %arg11[%60, %c0_37, %c0_38] : memref<8x2x32xf32, #tpu.memory_space<vmem>>, vector<1x2x32xf32>
    %62 = vector.shape_cast %61 : vector<1x2x32xf32> to vector<2x32xf32>
    %63 = arith.truncf %59 : vector<2x32xf32> to vector<2x32xbf16>
    %cst_39 = arith.constant dense<0.000000e+00> : vector<2x32xf32>
    %64 = tpu.matmul %63, %1, %cst_39 {dimension_numbers = #tpu.dot_dimension_numbers<[1], [0], [0], [1], [0, 0, 1, 1], [], []>} : vector<2x32xbf16>, vector<32x32xbf16>, vector<2x32xf32> -> vector<2x32xf32>
    %65 = arith.addf %62, %64 : vector<2x32xf32>
    %66 = math.tanh %65 : vector<2x32xf32>
    %c6_i32 = arith.constant 6 : i32
    %67 = arith.index_cast %c6_i32 : i32 to index
    %c0_40 = arith.constant 0 : index
    %c0_41 = arith.constant 0 : index
    %68 = vector.load %arg11[%67, %c0_40, %c0_41] : memref<8x2x32xf32, #tpu.memory_space<vmem>>, vector<1x2x32xf32>
    %69 = vector.shape_cast %68 : vector<1x2x32xf32> to vector<2x32xf32>
    %70 = arith.truncf %66 : vector<2x32xf32> to vector<2x32xbf16>
    %cst_42 = arith.constant dense<0.000000e+00> : vector<2x32xf32>
    %71 = tpu.matmul %70, %1, %cst_42 {dimension_numbers = #tpu.dot_dimension_numbers<[1], [0], [0], [1], [0, 0, 1, 1], [], []>} : vector<2x32xbf16>, vector<32x32xbf16>, vector<2x32xf32> -> vector<2x32xf32>
    %72 = arith.addf %69, %71 : vector<2x32xf32>
    %73 = math.tanh %72 : vector<2x32xf32>
    %c7_i32 = arith.constant 7 : i32
    %74 = arith.index_cast %c7_i32 : i32 to index
    %c0_43 = arith.constant 0 : index
    %c0_44 = arith.constant 0 : index
    %75 = vector.load %arg11[%74, %c0_43, %c0_44] : memref<8x2x32xf32, #tpu.memory_space<vmem>>, vector<1x2x32xf32>
    %76 = vector.shape_cast %75 : vector<1x2x32xf32> to vector<2x32xf32>
    %77 = arith.truncf %73 : vector<2x32xf32> to vector<2x32xbf16>
    %cst_45 = arith.constant dense<0.000000e+00> : vector<2x32xf32>
    %78 = tpu.matmul %77, %1, %cst_45 {dimension_numbers = #tpu.dot_dimension_numbers<[1], [0], [0], [1], [0, 0, 1, 1], [], []>} : vector<2x32xbf16>, vector<32x32xbf16>, vector<2x32xf32> -> vector<2x32xf32>
    %79 = arith.addf %76, %78 : vector<2x32xf32>
    %80 = math.tanh %79 : vector<2x32xf32>
    %c8_i32 = arith.constant 8 : i32
    %81 = arith.truncf %80 : vector<2x32xf32> to vector<2x32xbf16>
    %c0_46 = arith.constant 0 : index
    %c0_47 = arith.constant 0 : index
    %82 = vector.load %arg7[%c0_46, %c0_47] : memref<32x16xbf16, #tpu.memory_space<vmem>>, vector<32x16xbf16>
    %cst_48 = arith.constant dense<0.000000e+00> : vector<2x16xf32>
    %83 = tpu.matmul %81, %82, %cst_48 {dimension_numbers = #tpu.dot_dimension_numbers<[1], [0], [0], [1], [0, 0, 1, 1], [], []>} : vector<2x32xbf16>, vector<32x16xbf16>, vector<2x16xf32> -> vector<2x16xf32>
    %84 = arith.addf %23, %83 : vector<2x16xf32>
    %c0_49 = arith.constant 0 : index
    %c0_50 = arith.constant 0 : index
    %85 = vector.load %arg10[%c0_49, %c0_50] : memref<2x16xf32, #tpu.memory_space<vmem>>, vector<2x16xf32>
    tpu.vector_store %arg10[%c0_49, %c0_50], %84 {strides = array<i32>} : memref<2x16xf32, #tpu.memory_space<vmem>>, vector<2x16xf32>,
    return
  }
  func.func @transform_0(%arg0: i32) -> (i32, i32, i32) {
    %c0_i32 = arith.constant 0 : i32
    %c0_i32_0 = arith.constant 0 : i32
    %c0_i32_1 = arith.constant 0 : i32
    return %c0_i32, %arg0, %c0_i32_0 : i32, i32, i32
  }
  func.func @transform_1(%arg0: i32) -> (i32, i32) {
    %c0_i32 = arith.constant 0 : i32
    %c0_i32_0 = arith.constant 0 : i32
    %c0_i32_1 = arith.constant 0 : i32
    return %c0_i32, %c0_i32_0 : i32, i32
  }
  func.func @transform_2(%arg0: i32) -> (i32, i32) {
    %c0_i32 = arith.constant 0 : i32
    %c0_i32_0 = arith.constant 0 : i32
    %c0_i32_1 = arith.constant 0 : i32
    return %c0_i32, %c0_i32_0 : i32, i32
  }
  func.func @transform_3(%arg0: i32) -> (i32, i32) {
    %c0_i32 = arith.constant 0 : i32
    %c0_i32_0 = arith.constant 0 : i32
    %c0_i32_1 = arith.constant 0 : i32
    return %c0_i32, %c0_i32_0 : i32, i32
  }
  func.func @transform_4(%arg0: i32) -> (i32, i32) {
    %c0_i32 = arith.constant 0 : i32
    %c0_i32_0 = arith.constant 0 : i32
    %c0_i32_1 = arith.constant 0 : i32
    return %c0_i32, %c0_i32_0 : i32, i32
  }
  func.func @transform_5(%arg0: i32) -> (i32, i32) {
    %c0_i32 = arith.constant 0 : i32
    %c0_i32_0 = arith.constant 0 : i32
    %c0_i32_1 = arith.constant 0 : i32
    return %c0_i32, %c0_i32_0 : i32, i32
  }
  func.func @transform_6(%arg0: i32) -> (i32, i32) {
    %c0_i32 = arith.constant 0 : i32
    %c0_i32_0 = arith.constant 0 : i32
    %c0_i32_1 = arith.constant 0 : i32
    return %c0_i32, %c0_i32_0 : i32, i32
  }
  func.func @transform_7(%arg0: i32) -> (i32, i32) {
    %c0_i32 = arith.constant 0 : i32
    %c0_i32_0 = arith.constant 0 : i32
    %c0_i32_1 = arith.constant 0 : i32
    return %c0_i32, %c0_i32_0 : i32, i32
  }
  func.func @transform_8(%arg0: i32) -> (i32, i32) {
    %c0_i32 = arith.constant 0 : i32
    %c0_i32_0 = arith.constant 0 : i32
    %c0_i32_1 = arith.constant 0 : i32
    return %c0_i32, %c0_i32_0 : i32, i32
  }
  func.func @transform_9(%arg0: i32) -> (i32, i32) {
    %c0_i32 = arith.constant 0 : i32
    %c0_i32_0 = arith.constant 0 : i32
    return %arg0, %c0_i32 : i32, i32
  }
}

</mosaic_0001>

<llo_original>
// kernel: tpu_custom_call.1
$region0: #{tpu_custom_call.1}
  #allocation0 [shape = 'u32[]', space=smem, size = 0x4, offset = 0x4, fixed_abs, tag = 'smem constant byte address 0x4 - core index']
  #allocation1 [shape = 'u32[144,128]{1,0:T(1,128)}', space=vmem, size = 0x12000, scoped, tag = 'internal scratch']
  #allocation2 [shape = 'f32[8,2,32]{2,1,0:T(2,128)}', space=vmem, size = 0x2000, scoped, tag = 'scratch operand']
  %s0 = inlined_call_operand.vmem [shape: bf16[8,2,16], index: 0, kind: input, shape index: {}]
  %s1 = inlined_call_operand.vmem [shape: bf16[16,32], index: 1, kind: input, shape index: {}]
  %s2 = inlined_call_operand.vmem [shape: bf16[32,32], index: 2, kind: input, shape index: {}]
  %s3 = inlined_call_operand.vmem [shape: f32[1,32], index: 3, kind: input, shape index: {}]
  %s4 = inlined_call_operand.vmem [shape: bf16[16,32], index: 4, kind: input, shape index: {}]
  %s5 = inlined_call_operand.vmem [shape: f32[1,32], index: 5, kind: input, shape index: {}]
  %s6 = inlined_call_operand.vmem [shape: bf16[32,16], index: 6, kind: input, shape index: {}]
  %s7 = inlined_call_operand.vmem [shape: bf16[32,16], index: 7, kind: input, shape index: {}]
  %s8 = inlined_call_operand.vmem [shape: f32[1,16], index: 8, kind: input, shape index: {}]
  %s9 = inlined_call_operand.hbm [shape: f32[2,16], index: 9, kind: output, shape index: {}]
  %s10 = sld [smem:[#allocation0]]
  $region46: #{tpu_custom_call.1} parent=0
    _
  %s12 = ssub.s32 1, %s10
  %s13 = scalar_select 0, %s12, %s10
  $region1: #{tpu_custom_call.1} parent=0
    #allocation3 [shape = 'u8[1024]{0}', space=vmem, size = 0x400, scoped, tag = 'output window, operand 0, single buffered']
    #allocation4 [shape = 's32[1]{0}', space=sflag, size = 0x4, scoped, tag = 'scoped memory for tpu_custom_call.1']
    %14 = vsyncpa [#allocation4], 0
    // Predicated region
    $region2: #{tpu_custom_call.1} parent=1 // pred_check
      _
    $region3: #{tpu_custom_call.1} parent=1 // pred_check_branch
      %16 = sbr.rel (0) target = $region5
    $region4: #{tpu_custom_call.1} parent=1 // pred_region
      _
    $region5: #{tpu_custom_call.1} parent=1 // pred_fallthru
      _
    // Predicated region
    $region6: #{tpu_custom_call.1} parent=1 // pred_check
      _
    $region7: #{tpu_custom_call.1} parent=1 // pred_check_branch
      %18 = sbr.rel (0) target = $region9
    $region8: #{tpu_custom_call.1} parent=1 // pred_region
      _
    $region9: #{tpu_custom_call.1} parent=1 // pred_fallthru
      _
    // Predicated region
    $region10: #{tpu_custom_call.1} parent=1 // pred_check
      _
    $region11: #{tpu_custom_call.1} parent=1 // pred_check_branch
      %20 = sbr.rel (0) target = $region13
    $region12: #{tpu_custom_call.1} parent=1 // pred_region
      _
    $region13: #{tpu_custom_call.1} parent=1 // pred_fallthru
      _
    // Predicated region
    $region14: #{tpu_custom_call.1} parent=1 // pred_check
      _
    $region15: #{tpu_custom_call.1} parent=1 // pred_check_branch
      %22 = sbr.rel (0) target = $region17
    $region16: #{tpu_custom_call.1} parent=1 // pred_region
      _
    $region17: #{tpu_custom_call.1} parent=1 // pred_fallthru
      _
    // Predicated region
    $region18: #{tpu_custom_call.1} parent=1 // pred_check
      _
    $region19: #{tpu_custom_call.1} parent=1 // pred_check_branch
      %24 = sbr.rel (0) target = $region21
    $region20: #{tpu_custom_call.1} parent=1 // pred_region
      _
    $region21: #{tpu_custom_call.1} parent=1 // pred_fallthru
      _
    // Predicated region
    $region22: #{tpu_custom_call.1} parent=1 // pred_check
      _
    $region23: #{tpu_custom_call.1} parent=1 // pred_check_branch
      %26 = sbr.rel (0) target = $region25
    $region24: #{tpu_custom_call.1} parent=1 // pred_region
      _
    $region25: #{tpu_custom_call.1} parent=1 // pred_fallthru
      _
    // Predicated region
    $region26: #{tpu_custom_call.1} parent=1 // pred_check
      _
    $region27: #{tpu_custom_call.1} parent=1 // pred_check_branch
      %28 = sbr.rel (0) target = $region29
    $region28: #{tpu_custom_call.1} parent=1 // pred_region
      _
    $region29: #{tpu_custom_call.1} parent=1 // pred_fallthru
      _
    // Predicated region
    $region30: #{tpu_custom_call.1} parent=1 // pred_check
      _
    $region31: #{tpu_custom_call.1} parent=1 // pred_check_branch
      %30 = sbr.rel (0) target = $region33
    $region32: #{tpu_custom_call.1} parent=1 // pred_region
      _
    $region33: #{tpu_custom_call.1} parent=1 // pred_fallthru
      _
    // Predicated region
    $region34: #{tpu_custom_call.1} parent=1 // pred_check
      _
    $region35: #{tpu_custom_call.1} parent=1 // pred_check_branch
      %32 = sbr.rel (0) target = $region37
    $region36: #{tpu_custom_call.1} parent=1 // pred_region
      _
    $region37: #{tpu_custom_call.1} parent=1 // pred_fallthru
      _
    %v34 = vld [vmem:[%s0] sm:$0x1]
    %v35 = vld [vmem:[%s0 + $0x1] sm:$0x1]
    %v36 = vld [vmem:[%s0 + $0x2] sm:$0x1]
    %v37 = vld [vmem:[%s0 + $0x3] sm:$0x1]
    %v38 = vld [vmem:[%s0 + $0x4] sm:$0x1]
    %v39 = vld [vmem:[%s0 + $0x5] sm:$0x1]
    %v40 = vld [vmem:[%s0 + $0x6] sm:$0x1]
    %v41 = vld [vmem:[%s0 + $0x7] sm:$0x1]
    %v42 = vld [vmem:[%s2] sm:$0xf]
    %v43 = vld [vmem:[%s2 + $0x4] sm:$0xf]
    %v44 = vld [vmem:[%s2 + $0x8] sm:$0xf]
    %v45 = vld [vmem:[%s2 + $0xc] sm:$0xf]
    %v46 = vld [vmem:[%s1] sm:$0xf]
    %v47 = vld [vmem:[%s1 + $0x4] sm:$0xf]
    %v48 = vld [vmem:[%s3] sm:$0x1]
    %v50 = vlaneseq
    %v51 = vshrl.u32 %v50, 7
    %v52 = vsub.s32 0, %v51
    %v53 = vrot.slane %v48, %v52
    %v63 = vcombine.low %v34, %v35
    %v64 = vcombine.low %v36, %v37
    %v65 = vcombine.low %v38, %v39
    %v66 = vcombine.low %v40, %v41
    %v68 = vunpack.c.l.s4 1966171168
    %v69 = vunpack.c.0.s8 %v68
    %v70 = vlaneseq
    %v71 = vshrl.u32 %v70, 7
    %v72 = vsub.s32 %v69, %v71
    %v73 = vrot.slane %v63, %v72
    %v75 = vunpack.c.l.s4 1966171168
    %v76 = vunpack.c.0.s8 %v75
    %v77 = vlaneseq
    %v78 = vshrl.u32 %v77, 7
    %v79 = vsub.s32 %v76, %v78
    %v80 = vrot.slane %v64, %v79
    %v82 = vunpack.c.l.s4 1966171168
    %v83 = vunpack.c.0.s8 %v82
    %v84 = vlaneseq
    %v85 = vshrl.u32 %v84, 7
    %v86 = vsub.s32 %v83, %v85
    %v87 = vrot.slane %v65, %v86
    %v89 = vunpack.c.l.s4 1966171168
    %v90 = vunpack.c.0.s8 %v89
    %v91 = vlaneseq
    %v92 = vshrl.u32 %v91, 7
    %v93 = vsub.s32 %v90, %v92
    %v94 = vrot.slane %v66, %v93
    %v95 = vcombine.low %v73, %v80
    %v96 = vcombine.low %v87, %v94
    %v98 = vunpack.c.l.s4 1966171168
    %v99 = vunpack.c.0.s8 %v98
    %v100 = vlaneseq
    %v101 = vshrl.u32 %v100, 7
    %v102 = vsub.s32 %v99, %v101
    %v103 = vrot.slane %v95, %v102
    %v105 = vunpack.c.l.s4 1966171168
    %v106 = vunpack.c.0.s8 %v105
    %v107 = vlaneseq
    %v108 = vshrl.u32 %v107, 7
    %v109 = vsub.s32 %v106, %v108
    %v110 = vrot.slane %v96, %v109
    %v111 = vcombine.low %v103, %v110
    %v114 = vunpack.c.l.b16 %v46
    %v115 = vunpack.c.l.b16 %v47
    %v116 = vpack.c.b16 %v115, %v114
    %vm118 = vcmask 130048
    %v120 = vsel %vm118, %v111, 0
    %122 = vmatprep.subr.bf16.mxu0 0
    %123 = vmatpush1.bf16.msra.mxu0 %v116
    %124 = vmatprep.subr.bf16.mxu0 0
    %125 = vmatpush1.bf16.msra.mxu0 0
    %126 = vmatprep.subr.bf16.mxu0 0
    %127 = vmatpush1.bf16.msra.mxu0 0
    %128 = vmatprep.subr.bf16.mxu0 0
    %129 = vmatpush1.bf16.msra.mxu0 0
    %130 = vmatprep.subr.bf16.mxu0 0
    %131 = vmatpush1.bf16.msra.mxu0 0
    %132 = vmatprep.subr.bf16.mxu0 0
    %133 = vmatpush1.bf16.msra.mxu0 0
    %134 = vmatprep.subr.bf16.mxu0 0
    %135 = vmatpush1.bf16.msra.mxu0 0
    %136 = vmatprep.subr.bf16.mxu0 0
    %137 = vmatpush1.bf16.msra.mxu0 0
    %138 = vmatprep.subr.bf16.mxu0 0
    %139 = vmatpush1.bf16.msra.mxu0 0
    %140 = vmatprep.subr.bf16.mxu0 0
    %141 = vmatpush1.bf16.msra.mxu0 0
    %142 = vmatprep.subr.bf16.mxu0 0
    %143 = vmatpush1.bf16.msra.mxu0 0
    %144 = vmatprep.subr.bf16.mxu0 0
    %145 = vmatpush1.bf16.msra.mxu0 0
    %146 = vmatprep.subr.bf16.mxu0 0
    %147 = vmatpush1.bf16.msra.mxu0 0
    %148 = vmatprep.subr.bf16.mxu0 0
    %149 = vmatpush1.bf16.msra.mxu0 0
    %150 = vmatprep.subr.bf16.mxu0 0
    %151 = vmatpush1.bf16.msra.mxu0 0
    %152 = vmatprep.subr.bf16.mxu0 0
    %153 = vmatpush1.bf16.msra.mxu0 0
    %154 = vmatprep.mubr.bf16.mxu0 0
    %155 = vmatmul.mubr.bf16.gmra.mrb[0].mxu0 %v120
    %v156 = vpop.f32.mrb[0].mxu0
    %v157 = vadd.f32 %v53, %v156
    %v158 = vpop.f32.mrb[0].mxu0
    %v159 = vpop.f32.mrb[0].mxu0
    %v160 = vadd.f32 %v53, %v159
    %v161 = vpop.f32.mrb[0].mxu0
    %162 = vdwg.mxu0
    %v165 = vcombine.high %v157, %v157
    %v167 = vunpack.c.l.s4 1983009808
    %v168 = vunpack.c.0.s8 %v167
    %v169 = vlaneseq
    %v170 = vshrl.u32 %v169, 7
    %v171 = vsub.s32 %v168, %v170
    %v172 = vrot.slane %v157, %v171
    %v174 = vunpack.c.l.s4 1983009808
    %v175 = vunpack.c.0.s8 %v174
    %v176 = vlaneseq
    %v177 = vshrl.u32 %v176, 7
    %v178 = vsub.s32 %v175, %v177
    %v179 = vrot.slane %v165, %v178
    %v180 = vcombine.high %v172, %v172
    %v181 = vcombine.high %v179, %v179
    %v182 = vcombine.high %v160, %v160
    %v184 = vunpack.c.l.s4 1983009808
    %v185 = vunpack.c.0.s8 %v184
    %v186 = vlaneseq
    %v187 = vshrl.u32 %v186, 7
    %v188 = vsub.s32 %v185, %v187
    %v189 = vrot.slane %v160, %v188
    %v191 = vunpack.c.l.s4 1983009808
    %v192 = vunpack.c.0.s8 %v191
    %v193 = vlaneseq
    %v194 = vshrl.u32 %v193, 7
    %v195 = vsub.s32 %v192, %v194
    %v196 = vrot.slane %v182, %v195
    %v197 = vcombine.high %v189, %v189
    %v198 = vcombine.high %v196, %v196
    %vm207 = vcmask 254976
    %208 = vst.msk [vmem:[#allocation2] sm:$0x3] %vm207, %v172
    %209 = vst.msk [vmem:[#allocation2 + $0x2] sm:$0x3] %vm207, %v180
    %210 = vst.msk [vmem:[#allocation2 + $0x4] sm:$0x3] %vm207, %v179
    %211 = vst.msk [vmem:[#allocation2 + $0x6] sm:$0x3] %vm207, %v181
    %212 = vst.msk [vmem:[#allocation2 + $0x8] sm:$0x3] %vm207, %v189
    %213 = vst.msk [vmem:[#allocation2 + $0xa] sm:$0x3] %vm207, %v197
    %214 = vst.msk [vmem:[#allocation2 + $0xc] sm:$0x3] %vm207, %v196
    %215 = vst.msk [vmem:[#allocation2 + $0xe] sm:$0x3] %vm207, %v198
    %v216 = vld [vmem:[%s4] sm:$0xf]
    %v217 = vld [vmem:[%s4 + $0x4] sm:$0xf]
    %v218 = vld [vmem:[%s5] sm:$0x1]
    %v220 = vlaneseq
    %v221 = vshrl.u32 %v220, 7
    %v222 = vsub.s32 0, %v221
    %v223 = vrot.slane %v218, %v222
    %v227 = vunpack.c.l.b16 %v216
    %v228 = vunpack.c.l.b16 %v217
    %v229 = vpack.c.b16 %v228, %v227
    %v232 = vsel %vm118, %v41, 0
    %234 = vmatprep.subr.bf16.mxu0 0
    %235 = vmatpush1.bf16.msra.mxu0 %v229
    %236 = vmatprep.subr.bf16.mxu0 0
    %237 = vmatpush1.bf16.msra.mxu0 0
    %238 = vmatprep.subr.bf16.mxu0 0
    %239 = vmatpush1.bf16.msra.mxu0 0
    %240 = vmatprep.subr.bf16.mxu0 0
    %241 = vmatpush1.bf16.msra.mxu0 0
    %242 = vmatprep.subr.bf16.mxu0 0
    %243 = vmatpush1.bf16.msra.mxu0 0
    %244 = vmatprep.subr.bf16.mxu0 0
    %245 = vmatpush1.bf16.msra.mxu0 0
    %246 = vmatprep.subr.bf16.mxu0 0
    %247 = vmatpush1.bf16.msra.mxu0 0
    %248 = vmatprep.subr.bf16.mxu0 0
    %249 = vmatpush1.bf16.msra.mxu0 0
    %250 = vmatprep.subr.bf16.mxu0 0
    %251 = vmatpush1.bf16.msra.mxu0 0
    %252 = vmatprep.subr.bf16.mxu0 0
    %253 = vmatpush1.bf16.msra.mxu0 0
    %254 = vmatprep.subr.bf16.mxu0 0
    %255 = vmatpush1.bf16.msra.mxu0 0
    %256 = vmatprep.subr.bf16.mxu0 0
    %257 = vmatpush1.bf16.msra.mxu0 0
    %258 = vmatprep.subr.bf16.mxu0 0
    %259 = vmatpush1.bf16.msra.mxu0 0
    %260 = vmatprep.subr.bf16.mxu0 0
    %261 = vmatpush1.bf16.msra.mxu0 0
    %262 = vmatprep.subr.bf16.mxu0 0
    %263 = vmatpush1.bf16.msra.mxu0 0
    %264 = vmatprep.subr.bf16.mxu0 0
    %265 = vmatpush1.bf16.msra.mxu0 0
    %266 = vmatprep.mubr.bf16.mxu0 0
    %267 = vmatmul.mubr.bf16.gmra.mrb[0].mxu0 %v232
    %v268 = vpop.f32.mrb[0].mxu0
    %v269 = vadd.f32 %v223, %v268
    %v270 = vpop.f32.mrb[0].mxu0
    %v271 = vpop.f32.mrb[0].mxu0
    %v272 = vpop.f32.mrb[0].mxu0
    %273 = vdwg.mxu0
    %v274 = vtanh.pop %v269
    %v275 = vpack.c.bf16 %v274, %v274
    %v276 = vld [vmem:[%s7] sm:$0xf]
    %v277 = vld [vmem:[%s7 + $0x4] sm:$0xf]
    %v278 = vld [vmem:[%s7 + $0x8] sm:$0xf]
    %v279 = vld [vmem:[%s7 + $0xc] sm:$0xf]
    %v280 = vld [vmem:[%s8] sm:$0x1]
    %v282 = vlaneseq
    %v283 = vshrl.u32 %v282, 7
    %v284 = vsub.s32 0, %v283
    %v285 = vrot.slane %v280, %v284
    %v291 = vunpack.c.l.b16 %v276
    %v292 = vunpack.c.l.b16 %v277
    %v293 = vunpack.c.l.b16 %v278
    %v294 = vunpack.c.l.b16 %v279
    %v295 = vpack.c.b16 %v292, %v291
    %v296 = vpack.c.b16 %v294, %v293
    %vm299 = vcmask 261120
    %v301 = vsel %vm299, %v275, 0
    %303 = vmatprep.subr.bf16.mxu0 0
    %304 = vmatpush1.bf16.msra.mxu0 %v295
    %305 = vmatprep.subr.bf16.mxu0 0
    %306 = vmatpush1.bf16.msra.mxu0 %v296
    %307 = vmatprep.subr.bf16.mxu0 0
    %308 = vmatpush1.bf16.msra.mxu0 0
    %309 = vmatprep.subr.bf16.mxu0 0
    %310 = vmatpush1.bf16.msra.mxu0 0
    %311 = vmatprep.subr.bf16.mxu0 0
    %312 = vmatpush1.bf16.msra.mxu0 0
    %313 = vmatprep.subr.bf16.mxu0 0
    %314 = vmatpush1.bf16.msra.mxu0 0
    %315 = vmatprep.subr.bf16.mxu0 0
    %316 = vmatpush1.bf16.msra.mxu0 0
    %317 = vmatprep.subr.bf16.mxu0 0
    %318 = vmatpush1.bf16.msra.mxu0 0
    %319 = vmatprep.subr.bf16.mxu0 0
    %320 = vmatpush1.bf16.msra.mxu0 0
    %321 = vmatprep.subr.bf16.mxu0 0
    %322 = vmatpush1.bf16.msra.mxu0 0
    %323 = vmatprep.subr.bf16.mxu0 0
    %324 = vmatpush1.bf16.msra.mxu0 0
    %325 = vmatprep.subr.bf16.mxu0 0
    %326 = vmatpush1.bf16.msra.mxu0 0
    %327 = vmatprep.subr.bf16.mxu0 0
    %328 = vmatpush1.bf16.msra.mxu0 0
    %329 = vmatprep.subr.bf16.mxu0 0
    %330 = vmatpush1.bf16.msra.mxu0 0
    %331 = vmatprep.subr.bf16.mxu0 0
    %332 = vmatpush1.bf16.msra.mxu0 0
    %333 = vmatprep.subr.bf16.mxu0 0
    %334 = vmatpush1.bf16.msra.mxu0 0
    %335 = vmatprep.mubr.bf16.mxu0 0
    %336 = vmatmul.mubr.bf16.gmra.mrb[0].mxu0 %v301
    %v337 = vpop.f32.mrb[0].mxu0
    %v338 = vadd.f32 %v285, %v337
    %v339 = vpop.f32.mrb[0].mxu0
    %v340 = vpop.f32.mrb[0].mxu0
    %v341 = vpop.f32.mrb[0].mxu0
    %342 = vdwg.mxu0
    %v343 = vld [vmem:[#allocation2] sm:$0x3]
    %v348 = vunpack.c.l.b16 %v42
    %v349 = vunpack.c.l.b16 %v43
    %v350 = vunpack.c.l.b16 %v44
    %v351 = vunpack.c.l.b16 %v45
    %v352 = vpack.c.b16 %v349, %v348
    %v353 = vpack.c.b16 %v351, %v350
    %v357 = vsel %vm299, 0, 0
    %359 = vmatprep.subr.bf16.mxu0 0
    %360 = vmatpush1.bf16.msra.mxu0 %v352
    %361 = vmatprep.subr.bf16.mxu0 0
    %362 = vmatpush1.bf16.msra.mxu0 %v353
    %363 = vmatprep.subr.bf16.mxu0 0
    %364 = vmatpush1.bf16.msra.mxu0 0
    %365 = vmatprep.subr.bf16.mxu0 0
    %366 = vmatpush1.bf16.msra.mxu0 0
    %367 = vmatprep.subr.bf16.mxu0 0
    %368 = vmatpush1.bf16.msra.mxu0 0
    %369 = vmatprep.subr.bf16.mxu0 0
    %370 = vmatpush1.bf16.msra.mxu0 0
    %371 = vmatprep.subr.bf16.mxu0 0
    %372 = vmatpush1.bf16.msra.mxu0 0
    %373 = vmatprep.subr.bf16.mxu0 0
    %374 = vmatpush1.bf16.msra.mxu0 0
    %375 = vmatprep.subr.bf16.mxu0 0
    %376 = vmatpush1.bf16.msra.mxu0 0
    %377 = vmatprep.subr.bf16.mxu0 0
    %378 = vmatpush1.bf16.msra.mxu0 0
    %379 = vmatprep.subr.bf16.mxu0 0
    %380 = vmatpush1.bf16.msra.mxu0 0
    %381 = vmatprep.subr.bf16.mxu0 0
    %382 = vmatpush1.bf16.msra.mxu0 0
    %383 = vmatprep.subr.bf16.mxu0 0
    %384 = vmatpush1.bf16.msra.mxu0 0
    %385 = vmatprep.subr.bf16.mxu0 0
    %386 = vmatpush1.bf16.msra.mxu0 0
    %387 = vmatprep.subr.bf16.mxu0 0
    %388 = vmatpush1.bf16.msra.mxu0 0
    %389 = vmatprep.subr.bf16.mxu0 0
    %390 = vmatpush1.bf16.msra.mxu0 0
    %391 = vmatprep.mubr.bf16.mxu0 0
    %392 = vmatmul.mubr.bf16.gmra.mrb[0].mxu0 %v357
    %v393 = vpop.f32.mrb[0].mxu0
    %v394 = vadd.f32 0.0, %v393
    %v395 = vpop.f32.mrb[0].mxu0
    %v396 = vpop.f32.mrb[0].mxu0
    %v397 = vpop.f32.mrb[0].mxu0
    %398 = vdwg.mxu0
    %v399 = vadd.f32 %v343, %v394
    %v400 = vtanh.pop %v399
    %s401 = scalar_lea.vmem [#allocation2], 2
    %v402 = vld [vmem:[%s401] sm:$0x3]
    %v403 = vpack.c.bf16 %v400, %v400
    %v405 = vsel %vm299, %v403, 0
    %407 = vmatprep.subr.bf16.mxu0 0
    %408 = vmatpush1.bf16.msra.mxu0 %v352
    %409 = vmatprep.subr.bf16.mxu0 0
    %410 = vmatpush1.bf16.msra.mxu0 %v353
    %411 = vmatprep.subr.bf16.mxu0 0
    %412 = vmatpush1.bf16.msra.mxu0 0
    %413 = vmatprep.subr.bf16.mxu0 0
    %414 = vmatpush1.bf16.msra.mxu0 0
    %415 = vmatprep.subr.bf16.mxu0 0
    %416 = vmatpush1.bf16.msra.mxu0 0
    %417 = vmatprep.subr.bf16.mxu0 0
    %418 = vmatpush1.bf16.msra.mxu0 0
    %419 = vmatprep.subr.bf16.mxu0 0
    %420 = vmatpush1.bf16.msra.mxu0 0
    %421 = vmatprep.subr.bf16.mxu0 0
    %422 = vmatpush1.bf16.msra.mxu0 0
    %423 = vmatprep.subr.bf16.mxu0 0
    %424 = vmatpush1.bf16.msra.mxu0 0
    %425 = vmatprep.subr.bf16.mxu0 0
    %426 = vmatpush1.bf16.msra.mxu0 0
    %427 = vmatprep.subr.bf16.mxu0 0
    %428 = vmatpush1.bf16.msra.mxu0 0
    %429 = vmatprep.subr.bf16.mxu0 0
    %430 = vmatpush1.bf16.msra.mxu0 0
    %431 = vmatprep.subr.bf16.mxu0 0
    %432 = vmatpush1.bf16.msra.mxu0 0
    %433 = vmatprep.subr.bf16.mxu0 0
    %434 = vmatpush1.bf16.msra.mxu0 0
    %435 = vmatprep.subr.bf16.mxu0 0
    %436 = vmatpush1.bf16.msra.mxu0 0
    %437 = vmatprep.subr.bf16.mxu0 0
    %438 = vmatpush1.bf16.msra.mxu0 0
    %439 = vmatprep.mubr.bf16.mxu0 0
    %440 = vmatmul.mubr.bf16.gmra.mrb[0].mxu0 %v405
    %v441 = vpop.f32.mrb[0].mxu0
    %v442 = vadd.f32 0.0, %v441
    %v443 = vpop.f32.mrb[0].mxu0
    %v444 = vpop.f32.mrb[0].mxu0
    %v445 = vpop.f32.mrb[0].mxu0
    %446 = vdwg.mxu0
    %v447 = vadd.f32 %v402, %v442
    %v448 = vtanh.pop %v447
    %s449 = scalar_lea.vmem [#allocation2], 4
    %v450 = vld [vmem:[%s449] sm:$0x3]
    %v451 = vpack.c.bf16 %v448, %v448
    %v453 = vsel %vm299, %v451, 0
    %455 = vmatprep.subr.bf16.mxu0 0
    %456 = vmatpush1.bf16.msra.mxu0 %v352
    %457 = vmatprep.subr.bf16.mxu0 0
    %458 = vmatpush1.bf16.msra.mxu0 %v353
    %459 = vmatprep.subr.bf16.mxu0 0
    %460 = vmatpush1.bf16.msra.mxu0 0
    %461 = vmatprep.subr.bf16.mxu0 0
    %462 = vmatpush1.bf16.msra.mxu0 0
    %463 = vmatprep.subr.bf16.mxu0 0
    %464 = vmatpush1.bf16.msra.mxu0 0
    %465 = vmatprep.subr.bf16.mxu0 0
    %466 = vmatpush1.bf16.msra.mxu0 0
    %467 = vmatprep.subr.bf16.mxu0 0
    %468 = vmatpush1.bf16.msra.mxu0 0
    %469 = vmatprep.subr.bf16.mxu0 0
    %470 = vmatpush1.bf16.msra.mxu0 0
    %471 = vmatprep.subr.bf16.mxu0 0
    %472 = vmatpush1.bf16.msra.mxu0 0
    %473 = vmatprep.subr.bf16.mxu0 0
    %474 = vmatpush1.bf16.msra.mxu0 0
    %475 = vmatprep.subr.bf16.mxu0 0
    %476 = vmatpush1.bf16.msra.mxu0 0
    %477 = vmatprep.subr.bf16.mxu0 0
    %478 = vmatpush1.bf16.msra.mxu0 0
    %479 = vmatprep.subr.bf16.mxu0 0
    %480 = vmatpush1.bf16.msra.mxu0 0
    %481 = vmatprep.subr.bf16.mxu0 0
    %482 = vmatpush1.bf16.msra.mxu0 0
    %483 = vmatprep.subr.bf16.mxu0 0
    %484 = vmatpush1.bf16.msra.mxu0 0
    %485 = vmatprep.subr.bf16.mxu0 0
    %486 = vmatpush1.bf16.msra.mxu0 0
    %487 = vmatprep.mubr.bf16.mxu0 0
    %488 = vmatmul.mubr.bf16.gmra.mrb[0].mxu0 %v453
    %v489 = vpop.f32.mrb[0].mxu0
    %v490 = vadd.f32 0.0, %v489
    %v491 = vpop.f32.mrb[0].mxu0
    %v492 = vpop.f32.mrb[0].mxu0
    %v493 = vpop.f32.mrb[0].mxu0
    %494 = vdwg.mxu0
    %v495 = vadd.f32 %v450, %v490
    %v496 = vtanh.pop %v495
    %s497 = scalar_lea.vmem [#allocation2], 6
    %v498 = vld [vmem:[%s497] sm:$0x3]
    %v499 = vpack.c.bf16 %v496, %v496
    %v501 = vsel %vm299, %v499, 0
    %503 = vmatprep.subr.bf16.mxu0 0
    %504 = vmatpush1.bf16.msra.mxu0 %v352
    %505 = vmatprep.subr.bf16.mxu0 0
    %506 = vmatpush1.bf16.msra.mxu0 %v353
    %507 = vmatprep.subr.bf16.mxu0 0
    %508 = vmatpush1.bf16.msra.mxu0 0
    %509 = vmatprep.subr.bf16.mxu0 0
    %510 = vmatpush1.bf16.msra.mxu0 0
    %511 = vmatprep.subr.bf16.mxu0 0
    %512 = vmatpush1.bf16.msra.mxu0 0
    %513 = vmatprep.subr.bf16.mxu0 0
    %514 = vmatpush1.bf16.msra.mxu0 0
    %515 = vmatprep.subr.bf16.mxu0 0
    %516 = vmatpush1.bf16.msra.mxu0 0
    %517 = vmatprep.subr.bf16.mxu0 0
    %518 = vmatpush1.bf16.msra.mxu0 0
    %519 = vmatprep.subr.bf16.mxu0 0
    %520 = vmatpush1.bf16.msra.mxu0 0
    %521 = vmatprep.subr.bf16.mxu0 0
    %522 = vmatpush1.bf16.msra.mxu0 0
    %523 = vmatprep.subr.bf16.mxu0 0
    %524 = vmatpush1.bf16.msra.mxu0 0
    %525 = vmatprep.subr.bf16.mxu0 0
    %526 = vmatpush1.bf16.msra.mxu0 0
    %527 = vmatprep.subr.bf16.mxu0 0
    %528 = vmatpush1.bf16.msra.mxu0 0
    %529 = vmatprep.subr.bf16.mxu0 0
    %530 = vmatpush1.bf16.msra.mxu0 0
    %531 = vmatprep.subr.bf16.mxu0 0
    %532 = vmatpush1.bf16.msra.mxu0 0
    %533 = vmatprep.subr.bf16.mxu0 0
    %534 = vmatpush1.bf16.msra.mxu0 0
    %535 = vmatprep.mubr.bf16.mxu0 0
    %536 = vmatmul.mubr.bf16.gmra.mrb[0].mxu0 %v501
    %v537 = vpop.f32.mrb[0].mxu0
    %v538 = vadd.f32 0.0, %v537
    %v539 = vpop.f32.mrb[0].mxu0
    %v540 = vpop.f32.mrb[0].mxu0
    %v541 = vpop.f32.mrb[0].mxu0
    %542 = vdwg.mxu0
    %v543 = vadd.f32 %v498, %v538
    %v544 = vtanh.pop %v543
    %s545 = scalar_lea.vmem [#allocation2], 8
    %v546 = vld [vmem:[%s545] sm:$0x3]
    %v547 = vpack.c.bf16 %v544, %v544
    %v549 = vsel %vm299, %v547, 0
    %551 = vmatprep.subr.bf16.mxu0 0
    %552 = vmatpush1.bf16.msra.mxu0 %v352
    %553 = vmatprep.subr.bf16.mxu0 0
    %554 = vmatpush1.bf16.msra.mxu0 %v353
    %555 = vmatprep.subr.bf16.mxu0 0
    %556 = vmatpush1.bf16.msra.mxu0 0
    %557 = vmatprep.subr.bf16.mxu0 0
    %558 = vmatpush1.bf16.msra.mxu0 0
    %559 = vmatprep.subr.bf16.mxu0 0
    %560 = vmatpush1.bf16.msra.mxu0 0
    %561 = vmatprep.subr.bf16.mxu0 0
    %562 = vmatpush1.bf16.msra.mxu0 0
    %563 = vmatprep.subr.bf16.mxu0 0
    %564 = vmatpush1.bf16.msra.mxu0 0
    %565 = vmatprep.subr.bf16.mxu0 0
    %566 = vmatpush1.bf16.msra.mxu0 0
    %567 = vmatprep.subr.bf16.mxu0 0
    %568 = vmatpush1.bf16.msra.mxu0 0
    %569 = vmatprep.subr.bf16.mxu0 0
    %570 = vmatpush1.bf16.msra.mxu0 0
    %571 = vmatprep.subr.bf16.mxu0 0
    %572 = vmatpush1.bf16.msra.mxu0 0
    %573 = vmatprep.subr.bf16.mxu0 0
    %574 = vmatpush1.bf16.msra.mxu0 0
    %575 = vmatprep.subr.bf16.mxu0 0
    %576 = vmatpush1.bf16.msra.mxu0 0
    %577 = vmatprep.subr.bf16.mxu0 0
    %578 = vmatpush1.bf16.msra.mxu0 0
    %579 = vmatprep.subr.bf16.mxu0 0
    %580 = vmatpush1.bf16.msra.mxu0 0
    %581 = vmatprep.subr.bf16.mxu0 0
    %582 = vmatpush1.bf16.msra.mxu0 0
    %583 = vmatprep.mubr.bf16.mxu0 0
    %584 = vmatmul.mubr.bf16.gmra.mrb[0].mxu0 %v549
    %v585 = vpop.f32.mrb[0].mxu0
    %v586 = vadd.f32 0.0, %v585
    %v587 = vpop.f32.mrb[0].mxu0
    %v588 = vpop.f32.mrb[0].mxu0
    %v589 = vpop.f32.mrb[0].mxu0
    %590 = vdwg.mxu0
    %v591 = vadd.f32 %v546, %v586
    %v592 = vtanh.pop %v591
    %s593 = scalar_lea.vmem [#allocation2], 10
    %v594 = vld [vmem:[%s593] sm:$0x3]
    %v595 = vpack.c.bf16 %v592, %v592
    %v597 = vsel %vm299, %v595, 0
    %599 = vmatprep.subr.bf16.mxu0 0
    %600 = vmatpush1.bf16.msra.mxu0 %v352
    %601 = vmatprep.subr.bf16.mxu0 0
    %602 = vmatpush1.bf16.msra.mxu0 %v353
    %603 = vmatprep.subr.bf16.mxu0 0
    %604 = vmatpush1.bf16.msra.mxu0 0
    %605 = vmatprep.subr.bf16.mxu0 0
    %606 = vmatpush1.bf16.msra.mxu0 0
    %607 = vmatprep.subr.bf16.mxu0 0
    %608 = vmatpush1.bf16.msra.mxu0 0
    %609 = vmatprep.subr.bf16.mxu0 0
    %610 = vmatpush1.bf16.msra.mxu0 0
    %611 = vmatprep.subr.bf16.mxu0 0
    %612 = vmatpush1.bf16.msra.mxu0 0
    %613 = vmatprep.subr.bf16.mxu0 0
    %614 = vmatpush1.bf16.msra.mxu0 0
    %615 = vmatprep.subr.bf16.mxu0 0
    %616 = vmatpush1.bf16.msra.mxu0 0
    %617 = vmatprep.subr.bf16.mxu0 0
    %618 = vmatpush1.bf16.msra.mxu0 0
    %619 = vmatprep.subr.bf16.mxu0 0
    %620 = vmatpush1.bf16.msra.mxu0 0
    %621 = vmatprep.subr.bf16.mxu0 0
    %622 = vmatpush1.bf16.msra.mxu0 0
    %623 = vmatprep.subr.bf16.mxu0 0
    %624 = vmatpush1.bf16.msra.mxu0 0
    %625 = vmatprep.subr.bf16.mxu0 0
    %626 = vmatpush1.bf16.msra.mxu0 0
    %627 = vmatprep.subr.bf16.mxu0 0
    %628 = vmatpush1.bf16.msra.mxu0 0
    %629 = vmatprep.subr.bf16.mxu0 0
    %630 = vmatpush1.bf16.msra.mxu0 0
    %631 = vmatprep.mubr.bf16.mxu0 0
    %632 = vmatmul.mubr.bf16.gmra.mrb[0].mxu0 %v597
    %v633 = vpop.f32.mrb[0].mxu0
    %v634 = vadd.f32 0.0, %v633
    %v635 = vpop.f32.mrb[0].mxu0
    %v636 = vpop.f32.mrb[0].mxu0
    %v637 = vpop.f32.mrb[0].mxu0
    %638 = vdwg.mxu0
    %v639 = vadd.f32 %v594, %v634
    %v640 = vtanh.pop %v639
    %s641 = scalar_lea.vmem [#allocation2], 12
    %v642 = vld [vmem:[%s641] sm:$0x3]
    %v643 = vpack.c.bf16 %v640, %v640
    %v645 = vsel %vm299, %v643, 0
    %647 = vmatprep.subr.bf16.mxu0 0
    %648 = vmatpush1.bf16.msra.mxu0 %v352
    %649 = vmatprep.subr.bf16.mxu0 0
    %650 = vmatpush1.bf16.msra.mxu0 %v353
    %651 = vmatprep.subr.bf16.mxu0 0
    %652 = vmatpush1.bf16.msra.mxu0 0
    %653 = vmatprep.subr.bf16.mxu0 0
    %654 = vmatpush1.bf16.msra.mxu0 0
    %655 = vmatprep.subr.bf16.mxu0 0
    %656 = vmatpush1.bf16.msra.mxu0 0
    %657 = vmatprep.subr.bf16.mxu0 0
    %658 = vmatpush1.bf16.msra.mxu0 0
    %659 = vmatprep.subr.bf16.mxu0 0
    %660 = vmatpush1.bf16.msra.mxu0 0
    %661 = vmatprep.subr.bf16.mxu0 0
    %662 = vmatpush1.bf16.msra.mxu0 0
    %663 = vmatprep.subr.bf16.mxu0 0
    %664 = vmatpush1.bf16.msra.mxu0 0
    %665 = vmatprep.subr.bf16.mxu0 0
    %666 = vmatpush1.bf16.msra.mxu0 0
    %667 = vmatprep.subr.bf16.mxu0 0
    %668 = vmatpush1.bf16.msra.mxu0 0
    %669 = vmatprep.subr.bf16.mxu0 0
    %670 = vmatpush1.bf16.msra.mxu0 0
    %671 = vmatprep.subr.bf16.mxu0 0
    %672 = vmatpush1.bf16.msra.mxu0 0
    %673 = vmatprep.subr.bf16.mxu0 0
    %674 = vmatpush1.bf16.msra.mxu0 0
    %675 = vmatprep.subr.bf16.mxu0 0
    %676 = vmatpush1.bf16.msra.mxu0 0
    %677 = vmatprep.subr.bf16.mxu0 0
    %678 = vmatpush1.bf16.msra.mxu0 0
    %679 = vmatprep.mubr.bf16.mxu0 0
    %680 = vmatmul.mubr.bf16.gmra.mrb[0].mxu0 %v645
    %v681 = vpop.f32.mrb[0].mxu0
    %v682 = vadd.f32 0.0, %v681
    %v683 = vpop.f32.mrb[0].mxu0
    %v684 = vpop.f32.mrb[0].mxu0
    %v685 = vpop.f32.mrb[0].mxu0
    %686 = vdwg.mxu0
    %v687 = vadd.f32 %v642, %v682
    %v688 = vtanh.pop %v687
    %s689 = scalar_lea.vmem [#allocation2], 14
    %v690 = vld [vmem:[%s689] sm:$0x3]
    %v691 = vpack.c.bf16 %v688, %v688
    %v693 = vsel %vm299, %v691, 0
    %695 = vmatprep.subr.bf16.mxu0 0
    %696 = vmatpush1.bf16.msra.mxu0 %v352
    %697 = vmatprep.subr.bf16.mxu0 0
    %698 = vmatpush1.bf16.msra.mxu0 %v353
    %699 = vmatprep.subr.bf16.mxu0 0
    %700 = vmatpush1.bf16.msra.mxu0 0
    %701 = vmatprep.subr.bf16.mxu0 0
    %702 = vmatpush1.bf16.msra.mxu0 0
    %703 = vmatprep.subr.bf16.mxu0 0
    %704 = vmatpush1.bf16.msra.mxu0 0
    %705 = vmatprep.subr.bf16.mxu0 0
    %706 = vmatpush1.bf16.msra.mxu0 0
    %707 = vmatprep.subr.bf16.mxu0 0
    %708 = vmatpush1.bf16.msra.mxu0 0
    %709 = vmatprep.subr.bf16.mxu0 0
    %710 = vmatpush1.bf16.msra.mxu0 0
    %711 = vmatprep.subr.bf16.mxu0 0
    %712 = vmatpush1.bf16.msra.mxu0 0
    %713 = vmatprep.subr.bf16.mxu0 0
    %714 = vmatpush1.bf16.msra.mxu0 0
    %715 = vmatprep.subr.bf16.mxu0 0
    %716 = vmatpush1.bf16.msra.mxu0 0
    %717 = vmatprep.subr.bf16.mxu0 0
    %718 = vmatpush1.bf16.msra.mxu0 0
    %719 = vmatprep.subr.bf16.mxu0 0
    %720 = vmatpush1.bf16.msra.mxu0 0
    %721 = vmatprep.subr.bf16.mxu0 0
    %722 = vmatpush1.bf16.msra.mxu0 0
    %723 = vmatprep.subr.bf16.mxu0 0
    %724 = vmatpush1.bf16.msra.mxu0 0
    %725 = vmatprep.subr.bf16.mxu0 0
    %726 = vmatpush1.bf16.msra.mxu0 0
    %727 = vmatprep.mubr.bf16.mxu0 0
    %728 = vmatmul.mubr.bf16.gmra.mrb[0].mxu0 %v693
    %v729 = vpop.f32.mrb[0].mxu0
    %v730 = vadd.f32 0.0, %v729
    %v731 = vpop.f32.mrb[0].mxu0
    %v732 = vpop.f32.mrb[0].mxu0
    %v733 = vpop.f32.mrb[0].mxu0
    %734 = vdwg.mxu0
    %v735 = vadd.f32 %v690, %v730
    %v736 = vtanh.pop %v735
    %v737 = vpack.c.bf16 %v736, %v736
    %v738 = vld [vmem:[%s6] sm:$0xf]
    %v739 = vld [vmem:[%s6 + $0x4] sm:$0xf]
    %v740 = vld [vmem:[%s6 + $0x8] sm:$0xf]
    %v741 = vld [vmem:[%s6 + $0xc] sm:$0xf]
    %v746 = vunpack.c.l.b16 %v738
    %v747 = vunpack.c.l.b16 %v739
    %v748 = vunpack.c.l.b16 %v740
    %v749 = vunpack.c.l.b16 %v741
    %v750 = vpack.c.b16 %v747, %v746
    %v751 = vpack.c.b16 %v749, %v748
    %v755 = vsel %vm299, %v737, 0
    %757 = vmatprep.subr.bf16.mxu0 0
    %758 = vmatpush1.bf16.msra.mxu0 %v750
    %759 = vmatprep.subr.bf16.mxu0 0
    %760 = vmatpush1.bf16.msra.mxu0 %v751
    %761 = vmatprep.subr.bf16.mxu0 0
    %762 = vmatpush1.bf16.msra.mxu0 0
    %763 = vmatprep.subr.bf16.mxu0 0
    %764 = vmatpush1.bf16.msra.mxu0 0
    %765 = vmatprep.subr.bf16.mxu0 0
    %766 = vmatpush1.bf16.msra.mxu0 0
    %767 = vmatprep.subr.bf16.mxu0 0
    %768 = vmatpush1.bf16.msra.mxu0 0
    %769 = vmatprep.subr.bf16.mxu0 0
    %770 = vmatpush1.bf16.msra.mxu0 0
    %771 = vmatprep.subr.bf16.mxu0 0
    %772 = vmatpush1.bf16.msra.mxu0 0
    %773 = vmatprep.subr.bf16.mxu0 0
    %774 = vmatpush1.bf16.msra.mxu0 0
    %775 = vmatprep.subr.bf16.mxu0 0
    %776 = vmatpush1.bf16.msra.mxu0 0
    %777 = vmatprep.subr.bf16.mxu0 0
    %778 = vmatpush1.bf16.msra.mxu0 0
    %779 = vmatprep.subr.bf16.mxu0 0
    %780 = vmatpush1.bf16.msra.mxu0 0
    %781 = vmatprep.subr.bf16.mxu0 0
    %782 = vmatpush1.bf16.msra.mxu0 0
    %783 = vmatprep.subr.bf16.mxu0 0
    %784 = vmatpush1.bf16.msra.mxu0 0
    %785 = vmatprep.subr.bf16.mxu0 0
    %786 = vmatpush1.bf16.msra.mxu0 0
    %787 = vmatprep.subr.bf16.mxu0 0
    %788 = vmatpush1.bf16.msra.mxu0 0
    %789 = vmatprep.mubr.bf16.mxu0 0
    %790 = vmatmul.mubr.bf16.gmra.mrb[0].mxu0 %v755
    %v791 = vpop.f32.mrb[0].mxu0
    %v792 = vadd.f32 0.0, %v791
    %v793 = vpop.f32.mrb[0].mxu0
    %v794 = vpop.f32.mrb[0].mxu0
    %v795 = vpop.f32.mrb[0].mxu0
    %796 = vdwg.mxu0
    %v797 = vadd.f32 %v338, %v792
    %vm798 = vcmask 123904
    %799 = vst.msk [vmem:[#allocation3] sm:$0x3] %vm798, %v797
    // Predicated region
    $region38: #{tpu_custom_call.1} parent=1 // pred_check
      _
    $region39: #{tpu_custom_call.1} parent=1 // pred_check_branch
      %801 = sbr.rel (0) target = $region41
    $region40: #{tpu_custom_call.1} parent=1 // pred_region
      %s803 = ssub.s32 32, 32
      %804 = vsyncadd [#allocation4], %s803
      %s806 = sshll.u32 [#allocation3], 4
      %s807 = int_to_ptr.vmem [resolvable:$true] %s806
      %809 = dma.vmem_to_hbm [thread:$0]  %s807, 32, %s9, [#allocation4]
    $region41: #{tpu_custom_call.1} parent=1 // pred_fallthru
      _
    // Predicated region
    $region42: #{tpu_custom_call.1} parent=1 // pred_check
      _
    $region43: #{tpu_custom_call.1} parent=1 // pred_check_branch
      %811 = sbr.rel (0) target = $region45
    $region44: #{tpu_custom_call.1} parent=1 // pred_region
      %812 = dma.done [#allocation4], 32
    $region45: #{tpu_custom_call.1} parent=1 // pred_fallthru
      _
    %813 = vsyncpa [#allocation4], 1

</llo_original>
